<compile_context>
chip_gen: v7x
topology: tpu7x:2x2x1
jax: 0.10.0
libtpu: 0.0.40
codegen_flags: <defaults>
</compile_context>

<pallas_src>
import functools
import math

import jax
import jax.numpy as jnp
from jax.experimental import pallas as pl
from jax.experimental.pallas import tpu as pltpu


# ---------------------------------------------------------------------------
# Patch-embedding matmul (== Conv2d(in=C, out=D, kernel=stride=patch, bias=False))
# ---------------------------------------------------------------------------
def _matmul_kernel_single_k(x_ref, w_ref, o_ref):
    # Whole K fits one tile: no accumulator scratch / pl.when init needed.
    o_ref[...] = jnp.dot(x_ref[...], w_ref[...],
                         preferred_element_type=jnp.float32).astype(o_ref.dtype)


def _matmul_kernel(x_ref, w_ref, o_ref, acc_ref):
    @pl.when(pl.program_id(2) == 0)
    def _init():
        acc_ref[...] = jnp.zeros_like(acc_ref)

    acc_ref[...] += jnp.dot(x_ref[...], w_ref[...],
                            preferred_element_type=jnp.float32)

    @pl.when(pl.program_id(2) == pl.num_programs(2) - 1)
    def _store():
        o_ref[...] = acc_ref[...].astype(o_ref.dtype)


def _pick_tile(dim, pref, align):
    """Largest tile <= pref dividing dim, respecting alignment; else full dim."""
    if dim <= pref:
        return dim
    t = (pref // align) * align
    while t >= align:
        if dim % t == 0:
            return t
        t -= align
    return dim


def pallas_matmul(x, w, *, out_dtype=jnp.float32,
                  tm_pref=512, tn_pref=256, tk_pref=512):
    M, K = x.shape
    K2, N = w.shape
    assert K == K2
    # bf16 packs two rows per sublane -> keep M tiles 16-aligned.
    m_align = 16 if x.dtype == jnp.bfloat16 else 8
    tm = _pick_tile(M, tm_pref, m_align)
    tn = _pick_tile(N, tn_pref, 128)
    tk = _pick_tile(K, tk_pref, 128)
    gm, gn, gk = M // tm, N // tn, K // tk
    if gk == 1:
        return pl.pallas_call(
            _matmul_kernel_single_k,
            out_shape=jax.ShapeDtypeStruct((M, N), out_dtype),
            grid=(gm, gn),
            in_specs=[pl.BlockSpec((tm, K), lambda i, j: (i, 0)),
                      pl.BlockSpec((K, tn), lambda i, j: (0, j))],
            out_specs=pl.BlockSpec((tm, tn), lambda i, j: (i, j)),
            compiler_params=pltpu.CompilerParams(
                dimension_semantics=("parallel", "parallel"),
                vmem_limit_bytes=32 * 1024 * 1024),
        )(x, w)
    return pl.pallas_call(
        _matmul_kernel,
        out_shape=jax.ShapeDtypeStruct((M, N), out_dtype),
        grid=(gm, gn, gk),
        in_specs=[pl.BlockSpec((tm, tk), lambda i, j, k: (i, k)),
                  pl.BlockSpec((tk, tn), lambda i, j, k: (k, j))],
        out_specs=pl.BlockSpec((tm, tn), lambda i, j, k: (i, j)),
        scratch_shapes=[pltpu.VMEM((tm, tn), jnp.float32)],
        compiler_params=pltpu.CompilerParams(
            dimension_semantics=("parallel", "parallel", "arbitrary"),
            vmem_limit_bytes=32 * 1024 * 1024),
    )(x, w)


# ---------------------------------------------------------------------------
# Shared numerics helpers (f32 statistics regardless of input dtype).
# ---------------------------------------------------------------------------
def _layernorm(x, g, b, eps=1e-5):
    x = x.astype(jnp.float32)
    mu = jnp.mean(x, axis=-1, keepdims=True)
    var = jnp.mean(jnp.square(x - mu), axis=-1, keepdims=True)
    return (x - mu) * jax.lax.rsqrt(var + eps) * g + b


def prepare_encoder_inputs(params, *, num_heads, compute_dtype):
    """One-time parameter preprocessing:
       * qkv weight kept fused as (D, 3D) -> one fat MXU matmul in-kernel,
       * 1/sqrt(head_dim) folded into the q slice of w_qkv / b_qkv,
       * matmul weights + cls/pos cast to bf16; LN params & biases stay f32."""
    D = params["w_qkv"].shape[0]
    assert D % num_heads == 0
    hd = D // num_heads
    cdt = compute_dtype
    scale = 1.0 / math.sqrt(hd)
    w_qkv = params["w_qkv"].at[:, :D].multiply(scale)
    b_qkv = params["b_qkv"].reshape(1, 3 * D).at[:, :D].multiply(scale)
    return [
        params["cls"].reshape(1, D).astype(cdt),
        params["pos"].reshape(-1, D).astype(cdt),
        params["ln_pre_g"], params["ln_pre_b"],
        params["ln1_g"], params["ln1_b"],
        w_qkv.astype(cdt), b_qkv.astype(jnp.float32),
        params["w_o"].astype(cdt), params["b_o"],
        params["ln2_g"], params["ln2_b"],
        params["w_fc1"].astype(cdt), params["b_fc1"],
        params["w_fc2"].astype(cdt), params["b_fc2"],
        params["ln_post_g"], params["ln_post_b"],
        params["w_proj"].astype(cdt),
    ]


# ---------------------------------------------------------------------------
# Fused encoder kernel: CLS+pos -> ln_pre -> block -> ln_post(CLS) -> projector,
# one grid step per batch element ("parallel" -> sharded across TCs on v7x).
# ---------------------------------------------------------------------------
def _encoder_kernel(*refs, num_heads, head_dim, d_model, seq_len,
                    compute_dtype, num_weights):
    x_ref = refs[0]
    w_refs = refs[1:1 + num_weights]
    o_ref = refs[1 + num_weights]
    seq_scr, q_scr, k_scr, v_scr, ctx_scr = refs[2 + num_weights:]

    (cls_r, pos_r, ln_pre_g, ln_pre_b, ln1_g, ln1_b, w_qkv_r, b_qkv_r,
     w_o_r, b_o_r, ln2_g, ln2_b, w_fc1_r, b_fc1_r, w_fc2_r, b_fc2_r,
     ln_post_g, ln_post_b, w_proj_r) = w_refs

    S, D, H, hd = seq_len, d_model, num_heads, head_dim
    cdt = compute_dtype
    f32 = jnp.float32

    # Token sequence (bf16 scratch): row 0 = CLS + pos[0], rows 1.. = patches+pos.
    seq_scr[pl.ds(0, 1), :] = (cls_r[...] + pos_r[pl.ds(0, 1), :]).astype(cdt)
    seq_scr[pl.ds(1, S - 1), :] = (x_ref[0] + pos_r[pl.ds(1, S - 1), :]).astype(cdt)

    x = _layernorm(seq_scr[...], ln_pre_g[...], ln_pre_b[...])      # (S, D) f32

    # --- attention: one fused (S,D)@(D,3D) QKV matmul (scale pre-folded) ---
    h1 = _layernorm(x, ln1_g[...], ln1_b[...])
    qkv = jnp.dot(h1.astype(cdt), w_qkv_r[...],
                  preferred_element_type=f32) + b_qkv_r[...]        # (S, 3D) f32
    # Split into head-major bf16 scratch; the cast happens on the store.
    for hh in range(H):
        q_scr[hh] = qkv[:, hh * hd:(hh + 1) * hd].astype(cdt)
        k_scr[hh] = qkv[:, D + hh * hd:D + (hh + 1) * hd].astype(cdt)
        v_scr[hh] = qkv[:, 2 * D + hh * hd:2 * D + (hh + 1) * hd].astype(cdt)

    # fori-style head loop: only one head's (S,S) f32 scores live at a time.
    @pl.loop(0, H)
    def _attn_head(hh):
        qh = q_scr[hh]                                              # (S, hd) bf16
        kh = k_scr[hh]
        vh = v_scr[hh]
        s = jax.lax.dot_general(qh, kh, (((1,), (1,)), ((), ())),
                                preferred_element_type=f32)         # (S, S) f32
        m = jnp.max(s, axis=-1, keepdims=True)
        e = jnp.exp(s - m)
        den = jnp.sum(e, axis=-1, keepdims=True)
        p = e * pl.reciprocal(den, approx=True)   # EUP slot; intentional approx
        ctx_scr[hh] = jnp.dot(p.astype(cdt), vh,
                              preferred_element_type=f32).astype(cdt)

    # concat-heads layout -> single (S,D)@(D,D) output projection (K = D).
    ctx = jnp.concatenate([ctx_scr[hh] for hh in range(H)], axis=-1)  # (S, D)
    attn = jnp.dot(ctx, w_o_r[...], preferred_element_type=f32) + b_o_r[...]
    x = x + attn

    # --- MLP block (QuickGELU) ---
    h2 = _layernorm(x, ln2_g[...], ln2_b[...])
    h2 = jnp.dot(h2.astype(cdt), w_fc1_r[...],
                 preferred_element_type=f32) + b_fc1_r[...]
    h2 = h2 * jax.nn.sigmoid(1.702 * h2)
    h2 = jnp.dot(h2.astype(cdt), w_fc2_r[...],
                 preferred_element_type=f32) + b_fc2_r[...]
    x = x + h2

    # --- pooled CLS token, post layernorm, fused projector ---
    cls_tok = _layernorm(x[0:1, :], ln_post_g[...], ln_post_b[...])
    o_ref[0] = jnp.dot(cls_tok.astype(cdt), w_proj_r[...],
                       preferred_element_type=f32)                  # (1, P)


def encoder_forward(x_emb, enc_inputs, *, num_heads, compute_dtype):
    B, N, D = x_emb.shape
    S = enc_inputs[1].shape[0]
    P = enc_inputs[-1].shape[-1]
    H = num_heads
    hd = D // H
    assert S == N + 1

    kern = functools.partial(
        _encoder_kernel, num_heads=H, head_dim=hd, d_model=D, seq_len=S,
        compute_dtype=compute_dtype, num_weights=len(enc_inputs))

    scratch_shapes = [
        pltpu.VMEM((S, D), compute_dtype),       # token sequence (bf16)
        pltpu.VMEM((H, S, hd), compute_dtype),   # q, head-major
        pltpu.VMEM((H, S, hd), compute_dtype),   # k
        pltpu.VMEM((H, S, hd), compute_dtype),   # v
        pltpu.VMEM((H, S, hd), compute_dtype),   # ctx
    ]

    # VMEM budget from actual block/scratch sizes (+2x headroom), capped below
    # v7x's 64 MiB-per-TC physical VMEM.
    isz = jnp.dtype(compute_dtype).itemsize
    est = (sum(int(w.size) * w.dtype.itemsize for w in enc_inputs)
           + 2 * N * D * isz + 2 * P * 4
           + (S * D + 4 * H * S * hd) * isz)
    vmem_limit = int(min(max(2 * est, 16 << 20), 56 << 20))

    def build_specs(single_buffer):
        specs = [pl.BlockSpec((1, N, D), lambda b: (b, 0, 0))]
        for w in enc_inputs:
            idx = lambda b, _nd=w.ndim: (0,) * _nd
            if single_buffer:
                # Grid-invariant weights: no point double-buffering them.
                specs.append(pl.BlockSpec(w.shape, idx,
                                          pipeline_mode=pl.Buffered(1)))
            else:
                specs.append(pl.BlockSpec(w.shape, idx))
        return specs

    def call(single_buffer):
        out = pl.pallas_call(
            kern,
            out_shape=jax.ShapeDtypeStruct((B, 1, P), jnp.float32),
            grid=(B,),   # NOTE: on v7x keep B even so both TCs are fed.
            in_specs=build_specs(single_buffer),
            out_specs=pl.BlockSpec((1, 1, P), lambda b: (b, 0, 0)),
            scratch_shapes=scratch_shapes,
            compiler_params=pltpu.CompilerParams(
                dimension_semantics=("parallel",),
                vmem_limit_bytes=vmem_limit),
        )(x_emb, *enc_inputs)
        return jax.block_until_ready(out)

    try:
        out = call(single_buffer=True)
    except Exception:
        # Fallback if this jax/mosaic build rejects pipeline_mode=Buffered(1);
        # the only difference is weight buffering, so semantics are identical.
        out = call(single_buffer=False)
    return out.reshape(B, P)


# ---------------------------------------------------------------------------
# ClipVisionModel forward: embedding = projector(model(vision))
# ---------------------------------------------------------------------------
def clip_vision_forward(vision, params, *, patch, num_heads,
                        compute_dtype=jnp.bfloat16):
    B, C, H, W = vision.shape
    p = patch
    nh, nw = H // p, W // p
    N = nh * nw
    D = params["w_pe"].shape[1]
    # glue: extract non-overlapping patches, row-major (C, ph, pw) order
    x = vision.reshape(B, C, nh, p, nw, p)
    x = x.transpose(0, 2, 4, 1, 3, 5).reshape(B * N, C * p * p)
    # Pallas tiled matmul == patch-embed conv; bf16 MXU, bf16 HBM writeback.
    x = pallas_matmul(x.astype(compute_dtype),
                      params["w_pe"].astype(compute_dtype),
                      out_dtype=compute_dtype)
    x = x.reshape(B, N, D)
    enc_in = prepare_encoder_inputs(params, num_heads=num_heads,
                                    compute_dtype=compute_dtype)
    # Pallas fused: CLS+pos -> ln_pre -> block -> ln_post(CLS) -> projector.
    return encoder_forward(x, enc_in, num_heads=num_heads,
                           compute_dtype=compute_dtype)


# ---------------------------------------------------------------------------
# Pure-JAX reference (same math/dtypes; exact softmax division).
# ---------------------------------------------------------------------------
def _encoder_ref(seq, weights, *, num_heads, compute_dtype):
    (ln_pre_g, ln_pre_b, ln1_g, ln1_b, w_qkv, b_qkv, w_o, b_o,
     ln2_g, ln2_b, w_fc1, b_fc1, w_fc2, b_fc2,
     ln_post_g, ln_post_b, w_proj) = weights
    S, D = seq.shape
    H = num_heads
    hd = D // H
    cdt = compute_dtype
    f32 = jnp.float32

    x = _layernorm(seq, ln_pre_g, ln_pre_b)
    h1 = _layernorm(x, ln1_g, ln1_b)
    qkv = jnp.dot(h1.astype(cdt), w_qkv, preferred_element_type=f32) + b_qkv
    ctx_heads = []
    for hh in range(H):
        qh = qkv[:, hh * hd:(hh + 1) * hd].astype(cdt)
        kh = qkv[:, D + hh * hd:D + (hh + 1) * hd].astype(cdt)
        vh = qkv[:, 2 * D + hh * hd:2 * D + (hh + 1) * hd].astype(cdt)
        s = jax.lax.dot_general(qh, kh, (((1,), (1,)), ((), ())),
                                preferred_element_type=f32)
        e = jnp.exp(s - jnp.max(s, axis=-1, keepdims=True))
        p = e / jnp.sum(e, axis=-1, keepdims=True)
        ctx_heads.append(jnp.dot(p.astype(cdt), vh,
                                 preferred_element_type=f32).astype(cdt))
    ctx = jnp.concatenate(ctx_heads, axis=-1)
    x = x + jnp.dot(ctx, w_o, preferred_element_type=f32) + b_o

    h2 = _layernorm(x, ln2_g, ln2_b)
    h2 = jnp.dot(h2.astype(cdt), w_fc1, preferred_element_type=f32) + b_fc1
    h2 = h2 * jax.nn.sigmoid(1.702 * h2)
    h2 = jnp.dot(h2.astype(cdt), w_fc2, preferred_element_type=f32) + b_fc2
    x = x + h2

    cls_tok = _layernorm(x[0:1, :], ln_post_g, ln_post_b)
    return jnp.dot(cls_tok.astype(cdt), w_proj, preferred_element_type=f32)


def reference_forward(vision, params, *, patch, num_heads,
                      compute_dtype=jnp.bfloat16):
    B, C, H, W = vision.shape
    p = patch
    nh, nw = H // p, W // p
    N = nh * nw
    D = params["w_pe"].shape[1]
    x = vision.reshape(B, C, nh, p, nw, p)
    x = x.transpose(0, 2, 4, 1, 3, 5).reshape(B * N, C * p * p)
    x = jnp.dot(x.astype(compute_dtype), params["w_pe"].astype(compute_dtype),
                preferred_element_type=jnp.float32).astype(compute_dtype)
    x = x.reshape(B, N, D)
    enc_in = prepare_encoder_inputs(params, num_heads=num_heads,
                                    compute_dtype=compute_dtype)
    cls_tok, pos = enc_in[0], enc_in[1]
    weights = enc_in[2:]
    outs = []
    for b in range(B):
        seq = jnp.concatenate([cls_tok, x[b]], axis=0) + pos
        outs.append(_encoder_ref(seq, weights, num_heads=num_heads,
                                 compute_dtype=compute_dtype))
    return jnp.concatenate(outs, axis=0)


def init_params(key, C, p, D, S, mlp_dim, proj_dim):
    ks = jax.random.split(key, 12)
    nrm = lambda k, shape, sc: (sc * jax.random.normal(k, shape)).astype(jnp.float32)
    return {
        "w_pe": nrm(ks[0], (C * p * p, D), 0.02),
        "cls": nrm(ks[1], (1, 1, D), 0.02),
        "pos": nrm(ks[2], (1, S, D), 0.02),
        "ln_pre_g": jnp.ones((1, D), jnp.float32),
        "ln_pre_b": jnp.zeros((1, D), jnp.float32),
        "ln1_g": jnp.ones((1, D), jnp.float32),
        "ln1_b": jnp.zeros((1, D), jnp.float32),
        "w_qkv": nrm(ks[3], (D, 3 * D), 0.05),
        "b_qkv": nrm(ks[4], (1, 3 * D), 0.01),
        "w_o": nrm(ks[5], (D, D), 0.05),
        "b_o": nrm(ks[6], (1, D), 0.01),
        "ln2_g": jnp.ones((1, D), jnp.float32),
        "ln2_b": jnp.zeros((1, D), jnp.float32),
        "w_fc1": nrm(ks[7], (D, mlp_dim), 0.05),
        "b_fc1": nrm(ks[8], (1, mlp_dim), 0.01),
        "w_fc2": nrm(ks[9], (mlp_dim, D), 0.05),
        "b_fc2": nrm(ks[10], (1, D), 0.01),
        "ln_post_g": jnp.ones((1, D), jnp.float32),
        "ln_post_b": jnp.zeros((1, D), jnp.float32),
        "w_proj": nrm(ks[11], (D, proj_dim), 0.05),
    }


if __name__ == "__main__":
    B, C, H, W = 2, 4, 16, 16
    patch, D, num_heads, proj_dim = 8, 32, 2, 16
    S = (H // patch) * (W // patch) + 1          # patches + CLS
    key = jax.random.PRNGKey(0)
    kx, kp = jax.random.split(key)
    vision = jax.random.normal(kx, (B, C, H, W), dtype=jnp.float32)
    params = init_params(kp, C, patch, D, S, 4 * D, proj_dim)

    out = clip_vision_forward(vision, params, patch=patch, num_heads=num_heads)
    out = jax.block_until_ready(out)
    ref = reference_forward(vision, params, patch=patch, num_heads=num_heads)

    assert out.shape == (B, proj_dim), out.shape
    max_err = float(jnp.max(jnp.abs(out - ref)))
    assert max_err < 1e-2, f"mismatch vs reference: {max_err}"
    print("KERNEL_OK")
</pallas_src>

<mosaic_0001>
module attributes {stable_mosaic.version = 11 : i64} {
  func.func @_matmul_kernel_single_k(%arg0: i32, %arg1: i32, %arg2: memref<8x256xbf16, #tpu.memory_space<vmem>>, %arg3: memref<256x32xbf16, #tpu.memory_space<vmem>>, %arg4: memref<8x32xbf16, #tpu.memory_space<vmem>>) attributes {dimension_semantics = [#tpu.dimension_semantics<parallel>, #tpu.dimension_semantics<parallel>], iteration_bounds = array<i64: 1, 1>, scalar_prefetch = 0 : i64, scratch_operands = 0 : i64, tpu.core_type = #tpu.core_type<tc>, window_params = [{transform_indices = @transform_0, window_bounds = array<i64: 8, 256>}, {transform_indices = @transform_1, window_bounds = array<i64: 256, 32>}, {transform_indices = @transform_2, window_bounds = array<i64: 8, 32>}]} {
    %c0 = arith.constant 0 : index
    %c0_0 = arith.constant 0 : index
    %0 = vector.load %arg2[%c0, %c0_0] : memref<8x256xbf16, #tpu.memory_space<vmem>>, vector<8x256xbf16>
    %c0_1 = arith.constant 0 : index
    %c0_2 = arith.constant 0 : index
    %1 = vector.load %arg3[%c0_1, %c0_2] : memref<256x32xbf16, #tpu.memory_space<vmem>>, vector<256x32xbf16>
    %cst = arith.constant dense<0.000000e+00> : vector<8x32xf32>
    %2 = tpu.matmul %0, %1, %cst {dimension_numbers = #tpu.dot_dimension_numbers<[1], [0], [0], [1], [0, 0, 1, 1], [], []>} : vector<8x256xbf16>, vector<256x32xbf16>, vector<8x32xf32> -> vector<8x32xf32>
    %3 = arith.truncf %2 : vector<8x32xf32> to vector<8x32xbf16>
    %c0_3 = arith.constant 0 : index
    %c0_4 = arith.constant 0 : index
    %4 = vector.load %arg4[%c0_3, %c0_4] : memref<8x32xbf16, #tpu.memory_space<vmem>>, vector<8x32xbf16>
    tpu.vector_store %arg4[%c0_3, %c0_4], %3 {strides = array<i32>} : memref<8x32xbf16, #tpu.memory_space<vmem>>, vector<8x32xbf16>,
    return
  }
  func.func @transform_0(%arg0: i32, %arg1: i32) -> (i32, i32) {
    %c0_i32 = arith.constant 0 : i32
    %c0_i32_0 = arith.constant 0 : i32
    return %arg0, %c0_i32 : i32, i32
  }
  func.func @transform_1(%arg0: i32, %arg1: i32) -> (i32, i32) {
    %c0_i32 = arith.constant 0 : i32
    %c0_i32_0 = arith.constant 0 : i32
    return %c0_i32, %arg1 : i32, i32
  }
  func.func @transform_2(%arg0: i32, %arg1: i32) -> (i32, i32) {
    %c0_i32 = arith.constant 0 : i32
    return %arg0, %arg1 : i32, i32
  }
}

</mosaic_0001>

<llo_original>
// kernel: tpu_custom_call.1
$region0: #{tpu_custom_call.1}
  #allocation0 [shape = 'u32[]', space=smem, size = 0x4, offset = 0x4, fixed_abs, tag = 'smem constant byte address 0x4 - core index']
  #allocation1 [shape = 'u32[144,128]{1,0:T(1,128)}', space=vmem, size = 0x12000, scoped, tag = 'internal scratch']
  %s0 = inlined_call_operand.vmem [shape: bf16[8,256], index: 0, kind: input, shape index: {}]
  %s1 = inlined_call_operand.vmem [shape: bf16[256,32], index: 1, kind: input, shape index: {}]
  %s2 = inlined_call_operand.hbm [shape: bf16[8,32], index: 2, kind: output, shape index: {}]
  %s3 = sld [smem:[#allocation0]]
  $region18: #{tpu_custom_call.1} parent=0
    _
  %s5 = ssub.s32 1, %s3
  %s6 = scalar_select 0, %s5, %s3
  $region1: #{tpu_custom_call.1} parent=0
    #allocation2 [shape = 'u8[2048]{0}', space=vmem, size = 0x800, scoped, tag = 'output window, operand 0, single buffered']
    #allocation3 [shape = 's32[1]{0}', space=sflag, size = 0x4, scoped, tag = 'scoped memory for tpu_custom_call.1']
    %7 = vsyncpa [#allocation3], 0
    // Predicated region
    $region2: #{tpu_custom_call.1} parent=1 // pred_check
      _
    $region3: #{tpu_custom_call.1} parent=1 // pred_check_branch
      %9 = sbr.rel (0) target = $region5
    $region4: #{tpu_custom_call.1} parent=1 // pred_region
      _
    $region5: #{tpu_custom_call.1} parent=1 // pred_fallthru
      _
    // Predicated region
    $region6: #{tpu_custom_call.1} parent=1 // pred_check
      _
    $region7: #{tpu_custom_call.1} parent=1 // pred_check_branch
      %11 = sbr.rel (0) target = $region9
    $region8: #{tpu_custom_call.1} parent=1 // pred_region
      _
    $region9: #{tpu_custom_call.1} parent=1 // pred_fallthru
      _
    %v13 = vld [vmem:[%s0] sm:$0xff]
    %v14 = vld [vmem:[%s1] sm:$0xf]
    %v15 = vld [vmem:[%s1 + $0x4] sm:$0xf]
    %v16 = vld [vmem:[%s1 + $0x8] sm:$0xf]
    %v17 = vld [vmem:[%s1 + $0xc] sm:$0xf]
    %v18 = vld [vmem:[%s1 + $0x10] sm:$0xf]
    %v19 = vld [vmem:[%s1 + $0x14] sm:$0xf]
    %v20 = vld [vmem:[%s1 + $0x18] sm:$0xf]
    %v21 = vld [vmem:[%s1 + $0x1c] sm:$0xf]
    %v22 = vld [vmem:[%s1 + $0x20] sm:$0xf]
    %v23 = vld [vmem:[%s1 + $0x24] sm:$0xf]
    %v24 = vld [vmem:[%s1 + $0x28] sm:$0xf]
    %v25 = vld [vmem:[%s1 + $0x2c] sm:$0xf]
    %v26 = vld [vmem:[%s1 + $0x30] sm:$0xf]
    %v27 = vld [vmem:[%s1 + $0x34] sm:$0xf]
    %v28 = vld [vmem:[%s1 + $0x38] sm:$0xf]
    %v29 = vld [vmem:[%s1 + $0x3c] sm:$0xf]
    %v30 = vld [vmem:[%s1 + $0x40] sm:$0xf]
    %v31 = vld [vmem:[%s1 + $0x44] sm:$0xf]
    %v32 = vld [vmem:[%s1 + $0x48] sm:$0xf]
    %v33 = vld [vmem:[%s1 + $0x4c] sm:$0xf]
    %v34 = vld [vmem:[%s1 + $0x50] sm:$0xf]
    %v35 = vld [vmem:[%s1 + $0x54] sm:$0xf]
    %v36 = vld [vmem:[%s1 + $0x58] sm:$0xf]
    %v37 = vld [vmem:[%s1 + $0x5c] sm:$0xf]
    %v38 = vld [vmem:[%s1 + $0x60] sm:$0xf]
    %v39 = vld [vmem:[%s1 + $0x64] sm:$0xf]
    %v40 = vld [vmem:[%s1 + $0x68] sm:$0xf]
    %v41 = vld [vmem:[%s1 + $0x6c] sm:$0xf]
    %v42 = vld [vmem:[%s1 + $0x70] sm:$0xf]
    %v43 = vld [vmem:[%s1 + $0x74] sm:$0xf]
    %v44 = vld [vmem:[%s1 + $0x78] sm:$0xf]
    %v45 = vld [vmem:[%s1 + $0x7c] sm:$0xf]
    %v47 = vunpack.c.l.b16 %v13
    %v48 = vunpack.c.h.b16 %v13
    %v49 = vpack.c.b16 %v47, %v47
    %v50 = vpack.c.b16 %v48, %v48
    %v85 = vunpack.c.l.b16 %v14
    %v86 = vunpack.c.l.b16 %v15
    %v87 = vunpack.c.l.b16 %v16
    %v88 = vunpack.c.l.b16 %v17
    %v89 = vunpack.c.l.b16 %v18
    %v90 = vunpack.c.l.b16 %v19
    %v91 = vunpack.c.l.b16 %v20
    %v92 = vunpack.c.l.b16 %v21
    %v93 = vunpack.c.l.b16 %v22
    %v94 = vunpack.c.l.b16 %v23
    %v95 = vunpack.c.l.b16 %v24
    %v96 = vunpack.c.l.b16 %v25
    %v97 = vunpack.c.l.b16 %v26
    %v98 = vunpack.c.l.b16 %v27
    %v99 = vunpack.c.l.b16 %v28
    %v100 = vunpack.c.l.b16 %v29
    %v101 = vunpack.c.l.b16 %v30
    %v102 = vunpack.c.l.b16 %v31
    %v103 = vunpack.c.l.b16 %v32
    %v104 = vunpack.c.l.b16 %v33
    %v105 = vunpack.c.l.b16 %v34
    %v106 = vunpack.c.l.b16 %v35
    %v107 = vunpack.c.l.b16 %v36
    %v108 = vunpack.c.l.b16 %v37
    %v109 = vunpack.c.l.b16 %v38
    %v110 = vunpack.c.l.b16 %v39
    %v111 = vunpack.c.l.b16 %v40
    %v112 = vunpack.c.l.b16 %v41
    %v113 = vunpack.c.l.b16 %v42
    %v114 = vunpack.c.l.b16 %v43
    %v115 = vunpack.c.l.b16 %v44
    %v116 = vunpack.c.l.b16 %v45
    %v117 = vpack.c.b16 %v86, %v85
    %v118 = vpack.c.b16 %v88, %v87
    %v119 = vpack.c.b16 %v90, %v89
    %v120 = vpack.c.b16 %v92, %v91
    %v121 = vpack.c.b16 %v94, %v93
    %v122 = vpack.c.b16 %v96, %v95
    %v123 = vpack.c.b16 %v98, %v97
    %v124 = vpack.c.b16 %v100, %v99
    %v125 = vpack.c.b16 %v102, %v101
    %v126 = vpack.c.b16 %v104, %v103
    %v127 = vpack.c.b16 %v106, %v105
    %v128 = vpack.c.b16 %v108, %v107
    %v129 = vpack.c.b16 %v110, %v109
    %v130 = vpack.c.b16 %v112, %v111
    %v131 = vpack.c.b16 %v114, %v113
    %v132 = vpack.c.b16 %v116, %v115
    %149 = vmatprep.subr.bf16.mxu0 0
    %150 = vmatpush1.bf16.msra.mxu0 %v117
    %151 = vmatprep.subr.bf16.mxu0 0
    %152 = vmatpush1.bf16.msra.mxu0 %v118
    %153 = vmatprep.subr.bf16.mxu0 0
    %154 = vmatpush1.bf16.msra.mxu0 %v119
    %155 = vmatprep.subr.bf16.mxu0 0
    %156 = vmatpush1.bf16.msra.mxu0 %v120
    %157 = vmatprep.subr.bf16.mxu0 0
    %158 = vmatpush1.bf16.msra.mxu0 %v121
    %159 = vmatprep.subr.bf16.mxu0 0
    %160 = vmatpush1.bf16.msra.mxu0 %v122
    %161 = vmatprep.subr.bf16.mxu0 0
    %162 = vmatpush1.bf16.msra.mxu0 %v123
    %163 = vmatprep.subr.bf16.mxu0 0
    %164 = vmatpush1.bf16.msra.mxu0 %v124
    %165 = vmatprep.subr.bf16.mxu0 0
    %166 = vmatpush1.bf16.msra.mxu0 %v125
    %167 = vmatprep.subr.bf16.mxu0 0
    %168 = vmatpush1.bf16.msra.mxu0 %v126
    %169 = vmatprep.subr.bf16.mxu0 0
    %170 = vmatpush1.bf16.msra.mxu0 %v127
    %171 = vmatprep.subr.bf16.mxu0 0
    %172 = vmatpush1.bf16.msra.mxu0 %v128
    %173 = vmatprep.subr.bf16.mxu0 0
    %174 = vmatpush1.bf16.msra.mxu0 %v129
    %175 = vmatprep.subr.bf16.mxu0 0
    %176 = vmatpush1.bf16.msra.mxu0 %v130
    %177 = vmatprep.subr.bf16.mxu0 0
    %178 = vmatpush1.bf16.msra.mxu0 %v131
    %179 = vmatprep.subr.bf16.mxu0 0
    %180 = vmatpush1.bf16.msra.mxu0 %v132
    %181 = vmatprep.mubr.bf16.mxu0 %v50
    %182 = vmatmul.mubr.bf16.gmra.mrb[0].mxu0 %v49
    %v183 = vpop.f32.mrb[0].mxu0
    %v184 = vadd.f32 0.0, %v183
    %v185 = vpop.f32.mrb[0].mxu0
    %v186 = vpop.f32.mrb[0].mxu0
    %v187 = vpop.f32.mrb[0].mxu0
    %188 = vdwg.mxu0
    %v189 = vpack.c.bf16 %v184, %v184
    %vm190 = vcmask 257024
    %191 = vst.msk [vmem:[#allocation2] sm:$0xf] %vm190, %v189
    // Predicated region
    $region10: #{tpu_custom_call.1} parent=1 // pred_check
      _
    $region11: #{tpu_custom_call.1} parent=1 // pred_check_branch
      %193 = sbr.rel (0) target = $region13
    $region12: #{tpu_custom_call.1} parent=1 // pred_region
      %s195 = ssub.s32 64, 64
      %196 = vsyncadd [#allocation3], %s195
      %s198 = sshll.u32 [#allocation2], 4
      %s199 = int_to_ptr.vmem [resolvable:$true] %s198
      %201 = dma.vmem_to_hbm [thread:$0]  %s199, 64, %s2, [#allocation3]
    $region13: #{tpu_custom_call.1} parent=1 // pred_fallthru
      _
    // Predicated region
    $region14: #{tpu_custom_call.1} parent=1 // pred_check
      _
    $region15: #{tpu_custom_call.1} parent=1 // pred_check_branch
      %203 = sbr.rel (0) target = $region17
    $region16: #{tpu_custom_call.1} parent=1 // pred_region
      %204 = dma.done [#allocation3], 64
    $region17: #{tpu_custom_call.1} parent=1 // pred_fallthru
      _
    %205 = vsyncpa [#allocation3], 1

</llo_original>
